<compile_context>
chip_gen: v5e
topology: v5e:2x2
jax: 0.10.0
libtpu: 0.0.40
codegen_flags: <defaults>
</compile_context>

<pallas_src>
import functools

import jax
import jax.numpy as jnp
from jax.experimental import pallas as pl
from jax.experimental.pallas import tpu as pltpu


def _round_up(x, m):
    return ((x + m - 1) // m) * m


def _mlp_critic_kernel(x_ref, w1_ref, b1_ref, w2_ref, b2_ref, o_ref):
    # x_ref : (TB, D)   w1_ref: (D, H)   b1_ref: (1, H)
    # w2_ref: (1, H)    b2_ref: (1, 1) in SMEM          o_ref: (1, TB)
    h = jnp.dot(x_ref[...], w1_ref[...], preferred_element_type=jnp.float32)  # MXU
    h = jnp.maximum(h + b1_ref[...], 0.0)                  # bias + ReLU on the VPU
    # Second Linear (out_features == 1): VPU multiply + lane reduction instead of a
    # wasteful N=1 MXU pass.
    v = jnp.sum(h * w2_ref[...], axis=-1)                  # (TB,)
    o_ref[...] = (v[None, :] + b2_ref[0, 0]).astype(o_ref.dtype)  # lane-dense row store


@functools.partial(jax.jit, static_argnames=("tb",))
def mlp_critic_head(x, w1_t, b1, w2_row, b2, *, tb=256):
    """relu(x @ w1_t + b1) @ w2_row.T + b2, returned as (B, 1).

    x      : (B, D_in)  float32
    w1_t   : (D_in, H)  float32  -- first Linear weight, pre-transposed (in, out)
    b1     : (1, H)     float32
    w2_row : (1, H)     float32  -- second Linear weight as a row (out_features == 1)
    b2     : (1, 1)     float32
    tb     : batch-tile rows per grid step (multiple of 128 when B > tb).
    """
    B, D = x.shape
    H = w1_t.shape[1]

    if B <= tb:
        # Single grid step: the tile is the whole (sublane-rounded) batch; block shape
        # then equals the full padded array extent, so the (8,128) rule is satisfied.
        tb_eff = _round_up(max(B, 1), 8)
    else:
        assert tb % 128 == 0, "tb must be a multiple of 128 for the (1, tb) output block"
        tb_eff = tb
    b_pad = _round_up(B, tb_eff)
    if b_pad != B:
        x = jnp.pad(x, ((0, b_pad - B), (0, 0)))  # zero rows; sliced off below

    grid = (b_pad // tb_eff,)

    cost = pl.CostEstimate(
        flops=2 * b_pad * D * H + 4 * b_pad * H,
        transcendentals=0,
        bytes_accessed=4 * (b_pad * D + D * H + 2 * H + b_pad + 1),
    )

    out_row = pl.pallas_call(
        _mlp_critic_kernel,
        out_shape=jax.ShapeDtypeStruct((1, b_pad), jnp.float32),
        grid_spec=pltpu.PrefetchScalarGridSpec(
            num_scalar_prefetch=0,
            grid=grid,
            in_specs=[
                pl.BlockSpec((tb_eff, D), lambda i: (i, 0)),        # x tile (streams)
                pl.BlockSpec((D, H), lambda i: (0, 0)),             # W1 (resident)
                pl.BlockSpec((1, H), lambda i: (0, 0)),             # b1 (resident)
                pl.BlockSpec((1, H), lambda i: (0, 0)),             # w2 row (resident)
                pl.BlockSpec(memory_space=pltpu.MemorySpace.SMEM),  # b2 scalar
            ],
            out_specs=pl.BlockSpec((1, tb_eff), lambda i: (0, i)),  # lane-dense output
        ),
        compiler_params=pltpu.CompilerParams(
            # Batch axis is embarrassingly parallel -> megacore sharding on v7x.
            dimension_semantics=("parallel",),
        ),
        cost_estimate=cost,
    )(x, w1_t, b1, w2_row, b2)

    return out_row[0, :B].reshape(B, 1)


def orthogonal_init(key, shape):
    """Mimics nn.init.orthogonal_ (QR of a gaussian, sign-corrected). shape=(out, in)."""
    rows, cols = shape
    a = jax.random.normal(key, (max(rows, cols), min(rows, cols)), dtype=jnp.float32)
    q, r = jnp.linalg.qr(a)
    d = jnp.diag(r)
    q = q * jnp.where(d >= 0, 1.0, -1.0)[None, :]
    if rows < cols:
        q = q.T
    return q[:rows, :cols]


if __name__ == "__main__":
    # Small shapes consistent with the module's forward (x: [B, input_size]).
    INPUT_SIZE, HIDDEN = 128, 256

    key = jax.random.PRNGKey(0)
    k_x1, k_x2, k_w1, k_w2 = jax.random.split(key, 4)

    # Deterministic parameter init matching the module: orthogonal weights, zero biases.
    w1 = orthogonal_init(k_w1, (HIDDEN, INPUT_SIZE))     # PyTorch layout (out, in)
    w2 = orthogonal_init(k_w2, (1, HIDDEN))
    w1_t = jnp.asarray(w1.T, jnp.float32)                # (INPUT_SIZE, HIDDEN)
    w2_row = jnp.asarray(w2, jnp.float32)                # (1, HIDDEN)
    b1 = jnp.zeros((1, HIDDEN), jnp.float32)
    b2 = jnp.zeros((1, 1), jnp.float32)

    def reference(xx):
        return jnp.maximum(xx @ w1_t + b1, 0.0) @ w2_row.T + b2

    # (1) Small ragged batch: exercises the pad + single-tile path.
    x_small = jax.random.normal(k_x1, (10, INPUT_SIZE), dtype=jnp.float32)
    out_small = jax.block_until_ready(mlp_critic_head(x_small, w1_t, b1, w2_row, b2))
    assert out_small.shape == (10, 1)
    assert jnp.allclose(out_small, reference(x_small), atol=1e-3, rtol=1e-3)

    # (2) Multi-tile batch: exercises the tiled, lane-dense, megacore-parallel path.
    x_big = jax.random.normal(k_x2, (300, INPUT_SIZE), dtype=jnp.float32)
    out_big = jax.block_until_ready(mlp_critic_head(x_big, w1_t, b1, w2_row, b2, tb=128))
    assert out_big.shape == (300, 1)
    assert jnp.allclose(out_big, reference(x_big), atol=1e-3, rtol=1e-3)

    print("KERNEL_OK")
</pallas_src>

<mosaic_0001>
module attributes {stable_mosaic.version = 11 : i64} {
  func.func @_mlp_critic_kernel(%arg0: i32, %arg1: memref<16x128xf32, #tpu.memory_space<vmem>>, %arg2: memref<128x256xf32, #tpu.memory_space<vmem>>, %arg3: memref<1x256xf32, #tpu.memory_space<vmem>>, %arg4: memref<1x256xf32, #tpu.memory_space<vmem>>, %arg5: memref<1x1xf32, #tpu.memory_space<smem>>, %arg6: memref<1x16xf32, #tpu.memory_space<vmem>>) attributes {dimension_semantics = [#tpu.dimension_semantics<parallel>], iteration_bounds = array<i64: 1>, scalar_prefetch = 0 : i64, scratch_operands = 0 : i64, tpu.core_type = #tpu.core_type<tc>, window_params = [{transform_indices = @transform_0, window_bounds = array<i64: 16, 128>}, {pipeline_mode = #tpu.pipeline_mode<synchronous>, transform_indices = @transform_1, window_bounds = array<i64: 128, 256>}, {pipeline_mode = #tpu.pipeline_mode<synchronous>, transform_indices = @transform_2, window_bounds = array<i64: 1, 256>}, {pipeline_mode = #tpu.pipeline_mode<synchronous>, transform_indices = @transform_3, window_bounds = array<i64: 1, 256>}, {transform_indices = @transform_4, window_bounds = array<i64: 1, 1>}, {transform_indices = @transform_5, window_bounds = array<i64: 1, 16>}]} {
    %c0 = arith.constant 0 : index
    %c0_0 = arith.constant 0 : index
    %0 = vector.load %arg1[%c0, %c0_0] : memref<16x128xf32, #tpu.memory_space<vmem>>, vector<16x128xf32>
    %c0_1 = arith.constant 0 : index
    %c0_2 = arith.constant 0 : index
    %1 = vector.load %arg2[%c0_1, %c0_2] : memref<128x256xf32, #tpu.memory_space<vmem>>, vector<128x256xf32>
    %cst = arith.constant dense<0.000000e+00> : vector<16x256xf32>
    %2 = tpu.matmul %0, %1, %cst {dimension_numbers = #tpu.dot_dimension_numbers<[1], [0], [0], [1], [0, 0, 1, 1], [], []>} : vector<16x128xf32>, vector<128x256xf32>, vector<16x256xf32> -> vector<16x256xf32>
    %c0_3 = arith.constant 0 : index
    %c0_4 = arith.constant 0 : index
    %3 = vector.load %arg3[%c0_3, %c0_4] : memref<1x256xf32, #tpu.memory_space<vmem>>, vector<1x256xf32>
    %4 = vector.broadcast %3 : vector<1x256xf32> to vector<16x256xf32>
    %5 = arith.addf %2, %4 : vector<16x256xf32>
    %cst_5 = arith.constant 0.000000e+00 : f32
    %6 = vector.broadcast %cst_5 : f32 to vector<16x256xf32>
    %7 = arith.maximumf %5, %6 : vector<16x256xf32>
    %c0_6 = arith.constant 0 : index
    %c0_7 = arith.constant 0 : index
    %8 = vector.load %arg4[%c0_6, %c0_7] : memref<1x256xf32, #tpu.memory_space<vmem>>, vector<1x256xf32>
    %9 = vector.broadcast %8 : vector<1x256xf32> to vector<16x256xf32>
    %10 = arith.mulf %7, %9 : vector<16x256xf32>
    %cst_8 = arith.constant dense<0.000000e+00> : vector<16xf32>
    %11 = vector.multi_reduction <add>, %10, %cst_8 [1] : vector<16x256xf32> to vector<16xf32>
    %12 = vector.shape_cast %11 : vector<16xf32> to vector<1x16xf32>
    %c0_9 = arith.constant 0 : index
    %c0_10 = arith.constant 0 : index
    %13 = memref.load %arg5[%c0_9, %c0_10] : memref<1x1xf32, #tpu.memory_space<smem>>
    %14 = vector.broadcast %13 : f32 to vector<1x16xf32>
    %15 = arith.addf %12, %14 : vector<1x16xf32>
    %c0_11 = arith.constant 0 : index
    %c0_12 = arith.constant 0 : index
    %16 = vector.load %arg6[%c0_11, %c0_12] : memref<1x16xf32, #tpu.memory_space<vmem>>, vector<1x16xf32>
    tpu.vector_store %arg6[%c0_11, %c0_12], %15 {strides = array<i32>} : memref<1x16xf32, #tpu.memory_space<vmem>>, vector<1x16xf32>,
    return
  }
  func.func @transform_0(%arg0: i32) -> (i32, i32) {
    %c0_i32 = arith.constant 0 : i32
    %c0_i32_0 = arith.constant 0 : i32
    return %arg0, %c0_i32 : i32, i32
  }
  func.func @transform_1(%arg0: i32) -> (i32, i32) {
    %c0_i32 = arith.constant 0 : i32
    %c0_i32_0 = arith.constant 0 : i32
    %c0_i32_1 = arith.constant 0 : i32
    return %c0_i32, %c0_i32_0 : i32, i32
  }
  func.func @transform_2(%arg0: i32) -> (i32, i32) {
    %c0_i32 = arith.constant 0 : i32
    %c0_i32_0 = arith.constant 0 : i32
    %c0_i32_1 = arith.constant 0 : i32
    return %c0_i32, %c0_i32_0 : i32, i32
  }
  func.func @transform_3(%arg0: i32) -> (i32, i32) {
    %c0_i32 = arith.constant 0 : i32
    %c0_i32_0 = arith.constant 0 : i32
    %c0_i32_1 = arith.constant 0 : i32
    return %c0_i32, %c0_i32_0 : i32, i32
  }
  func.func @transform_4(%arg0: i32) -> (i32, i32) {
    %c0_i32 = arith.constant 0 : i32
    %c0_i32_0 = arith.constant 0 : i32
    %c0_i32_1 = arith.constant 0 : i32
    return %c0_i32, %c0_i32_0 : i32, i32
  }
  func.func @transform_5(%arg0: i32) -> (i32, i32) {
    %c0_i32 = arith.constant 0 : i32
    %c0_i32_0 = arith.constant 0 : i32
    return %c0_i32, %arg0 : i32, i32
  }
}

</mosaic_0001>

<llo_original>
// kernel: mlp_critic_head.1
$region0: #{mlp_critic_head.1}
  #allocation0 [shape = 'u32[]', space=smem, size = 0x4, offset = 0x4, fixed_abs, tag = 'smem constant byte address 0x4 - core index']
  #allocation1 [shape = 'u32[72,128]{1,0:T(1,128)}', space=vmem, size = 0x9000, scoped, tag = 'internal scratch']
  #allocation2 [shape = 'f32[1,1]{1,0:T(1,128)S(6)}', space=smem, size = 0x200, scoped, tag = 'scoped memory for mlp_critic_head.1']
  %s0 = inlined_call_operand.vmem [shape: f32[16,128], index: 0, kind: input, shape index: {}]
  %s1 = inlined_call_operand.hbm [shape: f32[128,256], index: 1, kind: input, shape index: {}]
  %s2 = inlined_call_operand.vmem [shape: f32[1,256], index: 2, kind: input, shape index: {}]
  %s3 = inlined_call_operand.vmem [shape: f32[1,256], index: 3, kind: input, shape index: {}]
  %s4 = inlined_call_operand.<no memory space> [shape: f32[1,1], index: 4, kind: input, shape index: {}]
  %s5 = inlined_call_operand.vmem [shape: f32[1,16], index: 5, kind: output, shape index: {}]
  %s6 = sld [smem:[#allocation0]]
  $region34: #{mlp_critic_head.1} parent=0
    _
  %s8 = ssub.s32 1, %s6
  %s9 = scalar_select 0, %s8, %s6
  %10 = sst [smem:[#allocation2]] %s4
  $region1: #{mlp_critic_head.1} parent=0
    #allocation3 [shape = 'u8[131072]{0}', space=vmem, size = 0x20000, scoped, tag = 'input window, operand 1, single buffered']
    #allocation4 [shape = 's32[1]{0}', space=sflag, size = 0x4, scoped, tag = 'scoped memory for mlp_critic_head.1']
    %11 = vsyncpa [#allocation4], 0
    // Predicated region
    $region2: #{mlp_critic_head.1} parent=1 // pred_check
      _
    $region3: #{mlp_critic_head.1} parent=1 // pred_check_branch
      %13 = sbr.rel (0) target = $region5
    $region4: #{mlp_critic_head.1} parent=1 // pred_region
      _
    $region5: #{mlp_critic_head.1} parent=1 // pred_fallthru
      _
    // Predicated region
    $region6: #{mlp_critic_head.1} parent=1 // pred_check
      _
    $region7: #{mlp_critic_head.1} parent=1 // pred_check_branch
      %15 = sbr.rel (0) target = $region9
    $region8: #{mlp_critic_head.1} parent=1 // pred_region
      %17 = vsyncadd [#allocation4], 0
      %s18 = sshll.u32 %s1, 4
      %s19 = int_to_ptr.hbm [resolvable:$true] %s18
      %s20 = sshll.u32 [#allocation3], 4
      %s21 = int_to_ptr.vmem [resolvable:$true] %s20
      %26 = dma.hbm_to_vmem [thread:$0]  %s19, 4096, %s21, [#allocation4], 256, 256, 16
    $region9: #{mlp_critic_head.1} parent=1 // pred_fallthru
      _
    // Predicated region
    $region10: #{mlp_critic_head.1} parent=1 // pred_check
      _
    $region11: #{mlp_critic_head.1} parent=1 // pred_check_branch
      %28 = sbr.rel (0) target = $region13
    $region12: #{mlp_critic_head.1} parent=1 // pred_region
      _
    $region13: #{mlp_critic_head.1} parent=1 // pred_fallthru
      _
    // Predicated region
    $region14: #{mlp_critic_head.1} parent=1 // pred_check
      _
    $region15: #{mlp_critic_head.1} parent=1 // pred_check_branch
      %30 = sbr.rel (0) target = $region17
    $region16: #{mlp_critic_head.1} parent=1 // pred_region
      _
    $region17: #{mlp_critic_head.1} parent=1 // pred_fallthru
      _
    // Predicated region
    $region18: #{mlp_critic_head.1} parent=1 // pred_check
      _
    $region19: #{mlp_critic_head.1} parent=1 // pred_check_branch
      %32 = sbr.rel (0) target = $region21
    $region20: #{mlp_critic_head.1} parent=1 // pred_region
      _
    $region21: #{mlp_critic_head.1} parent=1 // pred_fallthru
      _
    // Predicated region
    $region22: #{mlp_critic_head.1} parent=1 // pred_check
      _
    $region23: #{mlp_critic_head.1} parent=1 // pred_check_branch
      %34 = sbr.rel (0) target = $region25
    $region24: #{mlp_critic_head.1} parent=1 // pred_region
      %36 = dma.done [#allocation4], 4096
    $region25: #{mlp_critic_head.1} parent=1 // pred_fallthru
      _
    %v37 = vld [vmem:[%s0] sm:$0xff]
    %v38 = vld [vmem:[%s0 + $0x8] sm:$0xff]
    %v39 = vld [vmem:[#allocation3] sm:$0xff]
    %v40 = vld [vmem:[#allocation3 + $0x8] sm:$0xff]
    %v41 = vld [vmem:[#allocation3 + $0x10] sm:$0xff]
    %v42 = vld [vmem:[#allocation3 + $0x18] sm:$0xff]
    %v43 = vld [vmem:[#allocation3 + $0x20] sm:$0xff]
    %v44 = vld [vmem:[#allocation3 + $0x28] sm:$0xff]
    %v45 = vld [vmem:[#allocation3 + $0x30] sm:$0xff]
    %v46 = vld [vmem:[#allocation3 + $0x38] sm:$0xff]
    %v47 = vld [vmem:[#allocation3 + $0x40] sm:$0xff]
    %v48 = vld [vmem:[#allocation3 + $0x48] sm:$0xff]
    %v49 = vld [vmem:[#allocation3 + $0x50] sm:$0xff]
    %v50 = vld [vmem:[#allocation3 + $0x58] sm:$0xff]
    %v51 = vld [vmem:[#allocation3 + $0x60] sm:$0xff]
    %v52 = vld [vmem:[#allocation3 + $0x68] sm:$0xff]
    %v53 = vld [vmem:[#allocation3 + $0x70] sm:$0xff]
    %v54 = vld [vmem:[#allocation3 + $0x78] sm:$0xff]
    %v55 = vld [vmem:[#allocation3 + $0x80] sm:$0xff]
    %v56 = vld [vmem:[#allocation3 + $0x88] sm:$0xff]
    %v57 = vld [vmem:[#allocation3 + $0x90] sm:$0xff]
    %v58 = vld [vmem:[#allocation3 + $0x98] sm:$0xff]
    %v59 = vld [vmem:[#allocation3 + $0xa0] sm:$0xff]
    %v60 = vld [vmem:[#allocation3 + $0xa8] sm:$0xff]
    %v61 = vld [vmem:[#allocation3 + $0xb0] sm:$0xff]
    %v62 = vld [vmem:[#allocation3 + $0xb8] sm:$0xff]
    %v63 = vld [vmem:[#allocation3 + $0xc0] sm:$0xff]
    %v64 = vld [vmem:[#allocation3 + $0xc8] sm:$0xff]
    %v65 = vld [vmem:[#allocation3 + $0xd0] sm:$0xff]
    %v66 = vld [vmem:[#allocation3 + $0xd8] sm:$0xff]
    %v67 = vld [vmem:[#allocation3 + $0xe0] sm:$0xff]
    %v68 = vld [vmem:[#allocation3 + $0xe8] sm:$0xff]
    %v69 = vld [vmem:[#allocation3 + $0xf0] sm:$0xff]
    %v70 = vld [vmem:[#allocation3 + $0xf8] sm:$0xff]
    %v71 = vld [vmem:[%s2] sm:$0x3]
    %v73 = vperm.slane %v71, 0
    %v74 = vperm.slane %v71, 1
    %77 = vmatpush.msra.mxu0 %v69
    %78 = vmatpush.msra.mxu0 %v67
    %79 = vmatpush.msra.mxu0 %v65
    %80 = vmatpush.msra.mxu0 %v63
    %81 = vmatpush.msra.mxu0 %v61
    %82 = vmatpush.msra.mxu0 %v59
    %83 = vmatpush.msra.mxu0 %v57
    %84 = vmatpush.msra.mxu0 %v55
    %85 = vmatpush.msra.mxu0 %v53
    %86 = vmatpush.msra.mxu0 %v51
    %87 = vmatpush.msra.mxu0 %v49
    %88 = vmatpush.msra.mxu0 %v47
    %89 = vmatpush.msra.mxu0 %v45
    %90 = vmatpush.msra.mxu0 %v43
    %91 = vmatpush.msra.mxu0 %v41
    %92 = vmatpush.msra.mxu0 %v39
    %93 = vmatmul.f32.gmra.mxu0 %v37
    %v94 = vpop.f32.mrf.mxu0
    %v95 = vadd.f32 %v73, %v94
    %96 = vmatmul.f32.gmra.mxu0 %v38
    %v97 = vpop.f32.mrf.mxu0
    %v98 = vadd.f32 %v73, %v97
    %99 = vdwg.mxu0
    %100 = vmatpush.msra.mxu0 %v70
    %101 = vmatpush.msra.mxu0 %v68
    %102 = vmatpush.msra.mxu0 %v66
    %103 = vmatpush.msra.mxu0 %v64
    %104 = vmatpush.msra.mxu0 %v62
    %105 = vmatpush.msra.mxu0 %v60
    %106 = vmatpush.msra.mxu0 %v58
    %107 = vmatpush.msra.mxu0 %v56
    %108 = vmatpush.msra.mxu0 %v54
    %109 = vmatpush.msra.mxu0 %v52
    %110 = vmatpush.msra.mxu0 %v50
    %111 = vmatpush.msra.mxu0 %v48
    %112 = vmatpush.msra.mxu0 %v46
    %113 = vmatpush.msra.mxu0 %v44
    %114 = vmatpush.msra.mxu0 %v42
    %115 = vmatpush.msra.mxu0 %v40
    %116 = vmatmul.f32.gmra.mxu0 %v37
    %v117 = vpop.f32.mrf.mxu0
    %v118 = vadd.f32 %v74, %v117
    %119 = vmatmul.f32.gmra.mxu0 %v38
    %v120 = vpop.f32.mrf.mxu0
    %v121 = vadd.f32 %v74, %v120
    %122 = vdwg.mxu0
    %v123 = vmax.f32 %v95, 0.0
    %v124 = vmax.f32 %v118, 0.0
    %v125 = vmax.f32 %v98, 0.0
    %v126 = vmax.f32 %v121, 0.0
    %v127 = vld [vmem:[%s3] sm:$0x3]
    %v129 = vperm.slane %v127, 0
    %v130 = vperm.slane %v127, 1
    %v133 = vmul.f32 %v123, %v129
    %v134 = vmul.f32 %v124, %v130
    %v135 = vmul.f32 %v125, %v129
    %v136 = vmul.f32 %v126, %v130
    %v137 = vadd.f32 %v133, %v134
    %138 = vadd.xlane.f32.xlu0 %v137
    %v139 = vpop.xlane.xlu0 %138
    %v140 = vadd.f32 %v135, %v136
    %141 = vadd.xlane.f32.xlu0 %v140
    %v142 = vpop.xlane.xlu0 %141
    %s143 = sld [smem:[#allocation2]]
    %v144 = vstv %s143
    %v145 = vadd.f32 %v139, %v144
    %v146 = vadd.f32 %v142, %v144
    %v149 = vlaneseq
    %v150 = vand.u32 %v149, 127
    %v151 = vperm.slane %v145, %v150
    %v152 = vadd.s32 %v150, 4294967288
    %v153 = vperm.slane %v146, %v152
    %vm154 = vcmask 130112
    %v155 = vsel %vm154, %v153, %v151
    %vm157 = vcmask 122880
    %158 = vst.msk [vmem:[%s5] sm:$0x1] %vm157, %v155
    // Predicated region
    $region26: #{mlp_critic_head.1} parent=1 // pred_check
      _
    $region27: #{mlp_critic_head.1} parent=1 // pred_check_branch
      %160 = sbr.rel (0) target = $region29
    $region28: #{mlp_critic_head.1} parent=1 // pred_region
      _
    $region29: #{mlp_critic_head.1} parent=1 // pred_fallthru
      _
    // Predicated region
    $region30: #{mlp_critic_head.1} parent=1 // pred_check
      _
    $region31: #{mlp_critic_head.1} parent=1 // pred_check_branch
      %162 = sbr.rel (0) target = $region33
    $region32: #{mlp_critic_head.1} parent=1 // pred_region
      _
    $region33: #{mlp_critic_head.1} parent=1 // pred_fallthru
      _
    %163 = vsyncpa [#allocation4], 1

</llo_original>
